<compile_context>
chip_gen: v7x
topology: tpu7x:2x2x1
jax: 0.10.0
libtpu: 0.0.40
codegen_flags: <defaults>
</compile_context>

<pallas_src>
import math
import functools

import jax
import jax.numpy as jnp
from jax.experimental import pallas as pl
from jax.experimental.pallas import tpu as pltpu


# ----------------------------------------------------------------------------
# Relative position bias (small integer bucketing + embedding gather = glue).
# ----------------------------------------------------------------------------
def _relative_position_bucket(rel_pos, num_buckets=32, max_distance=128):
    ret = jnp.zeros_like(rel_pos)
    n = -rel_pos
    num_buckets //= 2
    ret = ret + (n < 0).astype(jnp.int32) * num_buckets
    n = jnp.abs(n)
    max_exact = num_buckets // 2
    is_small = n < max_exact
    # (maximum(n,1) only guards log(0); that branch is discarded by `where`)
    val_if_large = max_exact + (
        jnp.log(jnp.maximum(n, 1).astype(jnp.float32) / max_exact)
        / math.log(max_distance / max_exact)
        * (num_buckets - max_exact)
    ).astype(jnp.int32)
    val_if_large = jnp.minimum(val_if_large, num_buckets - 1)
    ret = ret + jnp.where(is_small, n, val_if_large)
    return ret


def relative_position_bias(n, emb, num_buckets=32, max_distance=128):
    q_pos = jnp.arange(n, dtype=jnp.int32)
    k_pos = jnp.arange(n, dtype=jnp.int32)
    rel_pos = k_pos[None, :] - q_pos[:, None]              # (n, n)
    rp_bucket = _relative_position_bucket(rel_pos, num_buckets, max_distance)
    values = emb[rp_bucket]                                # (n, n, heads)
    return jnp.transpose(values, (2, 0, 1)).astype(jnp.float32)  # (heads, n, n)


# ----------------------------------------------------------------------------
# Pallas kernel.
# Grid = (B, N // tq, heads); head is the (innermost) reduction axis for the
# fused output projection.
# ----------------------------------------------------------------------------
def _attention_kernel(x_q_ref, x_kv_ref, wq_ref, wk_ref, wv_ref, wo_ref,
                      bo_ref, bias_ref, o_ref, k_scr, v_scr, acc_ref, *, scale):
    qi = pl.program_id(1)
    h = pl.program_id(2)
    last_h = pl.num_programs(2) - 1

    # ---- K/V projection for this (batch, head); cached across q tiles -----
    @pl.when(qi == 0)
    def _():
        xkv = x_kv_ref[...].astype(jnp.bfloat16)                      # (N, D)
        k_scr[h] = jnp.dot(xkv, wk_ref[...],
                           preferred_element_type=jnp.float32
                           ).astype(jnp.bfloat16)                     # (N, dh)
        v_scr[h] = jnp.dot(xkv, wv_ref[...],
                           preferred_element_type=jnp.float32
                           ).astype(jnp.bfloat16)                     # (N, dh)

    # ---- reset fused output-projection accumulator at the first head ------
    @pl.when(h == 0)
    def _():
        acc_ref[...] = jnp.zeros_like(acc_ref)

    # ---- Q projection for this (q tile, head) ------------------------------
    xq = x_q_ref[...].astype(jnp.bfloat16)                            # (tq, D)
    q = jnp.dot(xq, wq_ref[...],
                preferred_element_type=jnp.float32).astype(jnp.bfloat16)  # (tq, dh)

    k = k_scr[h]                                                      # (N, dh) bf16
    v = v_scr[h]                                                      # (N, dh) bf16

    # logits = q k^T * scale + rel-pos bias   (f32 accumulate on the MXU)
    logits = jax.lax.dot_general(
        q, k, (((1,), (1,)), ((), ())), preferred_element_type=jnp.float32)
    logits = logits * scale + bias_ref[...]                           # (tq, N)

    # Softmax in f32; reciprocal goes to the EUP instead of a VALU divide.
    logits = logits - jnp.max(logits, axis=-1, keepdims=True)
    p = jnp.exp(logits)
    inv = pl.reciprocal(jnp.sum(p, axis=-1, keepdims=True), approx=True)
    attn = (p * inv).astype(jnp.bfloat16)                             # (tq, N)

    o_h = jnp.dot(attn, v, preferred_element_type=jnp.float32)        # (tq, dh)

    # Fused output projection, accumulated over heads.
    acc_ref[...] += jnp.dot(o_h.astype(jnp.bfloat16), wo_ref[...],
                            preferred_element_type=jnp.float32)        # (tq, D)

    @pl.when(h == last_h)
    def _():
        o_ref[...] = (acc_ref[...] + bo_ref[...]).astype(o_ref.dtype)


def _choose_q_tile(n):
    # Prefer 256-wide q tiles (v6e MXU is 2x256x256), then other multiples of 8.
    for t in (256, 512, 128, 64, 32, 16, 8):
        if t <= n and n % t == 0:
            return t
    return n


def space_temporal_attention(x, params, *, heads, dim_head):
    b, n, dim = x.shape
    inner = heads * dim_head
    scale = dim_head ** (-0.5)
    tq = _choose_q_tile(n)
    nq = n // tq

    bias = relative_position_bias(n, params["rel_emb"])          # (H, n, n) f32

    bf16 = jnp.bfloat16
    # Per-head weight layouts (free wrapper-side reshapes, cast to bf16 once).
    wq_r = params["wq"].reshape(dim, heads, dim_head).transpose(1, 0, 2).astype(bf16)
    wk_r = params["wkv"][:, :inner].reshape(dim, heads, dim_head
                                            ).transpose(1, 0, 2).astype(bf16)
    wv_r = params["wkv"][:, inner:].reshape(dim, heads, dim_head
                                            ).transpose(1, 0, 2).astype(bf16)
    wo_r = params["wo"].reshape(heads, dim_head, dim).astype(bf16)
    bo2 = params["bo"].reshape(1, dim).astype(jnp.float32)

    kernel = functools.partial(_attention_kernel, scale=scale)

    cost = pl.CostEstimate(
        flops=int(2 * b * (4 * n * dim * inner + 2 * heads * n * n * dim_head)),
        transcendentals=int(b * heads * n * n),
        bytes_accessed=int(4 * b * n * dim * 3 + 4 * b * heads * n * n
                           + 2 * 4 * dim * inner),
    )

    grid_spec = pltpu.PrefetchScalarGridSpec(
        num_scalar_prefetch=0,
        grid=(b, nq, heads),
        in_specs=[
            # x for the Q projection: one q tile per step.
            pl.BlockSpec((pl.Squeezed(), tq, dim), lambda bi, qi, h: (bi, qi, 0)),
            # x for the K/V projection: whole sequence; re-DMA'd only when b changes.
            pl.BlockSpec((pl.Squeezed(), n, dim), lambda bi, qi, h: (bi, 0, 0)),
            # per-head weight slices.
            pl.BlockSpec((pl.Squeezed(), dim, dim_head), lambda bi, qi, h: (h, 0, 0)),
            pl.BlockSpec((pl.Squeezed(), dim, dim_head), lambda bi, qi, h: (h, 0, 0)),
            pl.BlockSpec((pl.Squeezed(), dim, dim_head), lambda bi, qi, h: (h, 0, 0)),
            pl.BlockSpec((pl.Squeezed(), dim_head, dim), lambda bi, qi, h: (h, 0, 0)),
            # output bias (tiny, constant block).
            pl.BlockSpec((1, dim), lambda bi, qi, h: (0, 0)),
            # relative-position bias: only a (tq, n) slab resident per step.
            pl.BlockSpec((pl.Squeezed(), tq, n), lambda bi, qi, h: (h, qi, 0)),
        ],
        out_specs=pl.BlockSpec((pl.Squeezed(), tq, dim),
                               lambda bi, qi, h: (bi, qi, 0)),
        scratch_shapes=[
            pltpu.VMEM((heads, n, dim_head), jnp.bfloat16),   # K cache (per batch)
            pltpu.VMEM((heads, n, dim_head), jnp.bfloat16),   # V cache (per batch)
            pltpu.VMEM((tq, dim), jnp.float32),               # output-proj accumulator
        ],
    )

    return pl.pallas_call(
        kernel,
        out_shape=jax.ShapeDtypeStruct((b, n, dim), x.dtype),
        grid_spec=grid_spec,
        compiler_params=pltpu.CompilerParams(
            # q-tile and head axes carry scratch state / accumulation, so they
            # must stay sequential ("arbitrary"); batch is parallel.
            dimension_semantics=("parallel", "arbitrary", "arbitrary"),
            vmem_limit_bytes=64 * 1024 * 1024,
        ),
        cost_estimate=cost,
    )(x, x, wq_r, wk_r, wv_r, wo_r, bo2, bias)


# ----------------------------------------------------------------------------
# Pure-JAX (f32) reference for verification.
# ----------------------------------------------------------------------------
def reference(x, params, *, heads, dim_head):
    b, n, dim = x.shape
    inner = heads * dim_head
    q = x @ params["wq"]
    kv = x @ params["wkv"]
    k, v = kv[..., :inner], kv[..., inner:]

    def split_heads(t):
        return t.reshape(b, n, heads, dim_head).transpose(0, 2, 1, 3)

    qh, kh, vh = map(split_heads, (q, k, v))
    dots = jnp.einsum("bhid,bhjd->bhij", qh, kh) * (dim_head ** -0.5)
    dots = dots + relative_position_bias(n, params["rel_emb"])[None]
    attn = jax.nn.softmax(dots, axis=-1)
    out = jnp.einsum("bhij,bhjd->bhid", attn, vh)
    out = out.transpose(0, 2, 1, 3).reshape(b, n, inner)
    return out @ params["wo"] + params["bo"]


if __name__ == "__main__":
    B, N, DIM = 2, 8, 32
    HEADS, DIM_HEAD = 4, 16
    NUM_BUCKETS = 32
    INNER = HEADS * DIM_HEAD

    key = jax.random.PRNGKey(0)
    kx, kq, kkv, kwo, kbo, kemb = jax.random.split(key, 6)

    x = jax.random.normal(kx, (B, N, DIM), dtype=jnp.float32)
    params = {
        "wq": 0.05 * jax.random.normal(kq, (DIM, INNER), dtype=jnp.float32),
        "wkv": 0.05 * jax.random.normal(kkv, (DIM, 2 * INNER), dtype=jnp.float32),
        "wo": 0.05 * jax.random.normal(kwo, (INNER, DIM), dtype=jnp.float32),
        "bo": 0.01 * jax.random.normal(kbo, (DIM,), dtype=jnp.float32),
        "rel_emb": 0.02 * jax.random.normal(kemb, (NUM_BUCKETS, HEADS),
                                            dtype=jnp.float32),
    }

    out = space_temporal_attention(x, params, heads=HEADS, dim_head=DIM_HEAD)
    out = jax.block_until_ready(out)

    ref = reference(x, params, heads=HEADS, dim_head=DIM_HEAD)
    assert out.shape == (B, N, DIM)
    # bf16 MXU operands (f32 accumulation) -> relaxed tolerance vs f32 reference.
    assert jnp.allclose(out, ref, atol=2e-2, rtol=2e-2), "mismatch vs reference"

    print("KERNEL_OK")
</pallas_src>

<mosaic_0001>
module attributes {stable_mosaic.version = 11 : i64} {
  func.func @_attention_kernel(%arg0: i32, %arg1: i32, %arg2: i32, %arg3: memref<1x8x32xf32, #tpu.memory_space<vmem>>, %arg4: memref<1x8x32xf32, #tpu.memory_space<vmem>>, %arg5: memref<1x32x16xbf16, #tpu.memory_space<vmem>>, %arg6: memref<1x32x16xbf16, #tpu.memory_space<vmem>>, %arg7: memref<1x32x16xbf16, #tpu.memory_space<vmem>>, %arg8: memref<1x16x32xbf16, #tpu.memory_space<vmem>>, %arg9: memref<1x32xf32, #tpu.memory_space<vmem>>, %arg10: memref<1x8x8xf32, #tpu.memory_space<vmem>>, %arg11: memref<1x8x32xf32, #tpu.memory_space<vmem>>, %arg12: memref<4x8x16xbf16, #tpu.memory_space<vmem>>, %arg13: memref<4x8x16xbf16, #tpu.memory_space<vmem>>, %arg14: memref<8x32xf32, #tpu.memory_space<vmem>>) attributes {dimension_semantics = [#tpu.dimension_semantics<parallel>, #tpu.dimension_semantics<arbitrary>, #tpu.dimension_semantics<arbitrary>], iteration_bounds = array<i64: 2, 1, 4>, scalar_prefetch = 0 : i64, scratch_operands = 3 : i64, tpu.core_type = #tpu.core_type<tc>, window_params = [{transform_indices = @transform_0, window_bounds = array<i64: 1, 8, 32>}, {transform_indices = @transform_1, window_bounds = array<i64: 1, 8, 32>}, {transform_indices = @transform_2, window_bounds = array<i64: 1, 32, 16>}, {transform_indices = @transform_3, window_bounds = array<i64: 1, 32, 16>}, {transform_indices = @transform_4, window_bounds = array<i64: 1, 32, 16>}, {transform_indices = @transform_5, window_bounds = array<i64: 1, 16, 32>}, {pipeline_mode = #tpu.pipeline_mode<synchronous>, transform_indices = @transform_6, window_bounds = array<i64: 1, 32>}, {transform_indices = @transform_7, window_bounds = array<i64: 1, 8, 8>}, {transform_indices = @transform_8, window_bounds = array<i64: 1, 8, 32>}]} {
    %c0_i32 = arith.constant 0 : i32
    %0 = arith.cmpi eq, %arg1, %c0_i32 : i32
    %1 = arith.extui %0 : i1 to i32
    %c0_i32_0 = arith.constant 0 : i32
    %2 = arith.cmpi ne, %1, %c0_i32_0 : i32
    scf.if %2 {
      %c0_29 = arith.constant 0 : index
      %c0_30 = arith.constant 0 : index
      %c0_31 = arith.constant 0 : index
      %47 = vector.load %arg4[%c0_29, %c0_30, %c0_31] : memref<1x8x32xf32, #tpu.memory_space<vmem>>, vector<1x8x32xf32>
      %48 = vector.shape_cast %47 : vector<1x8x32xf32> to vector<8x32xf32>
      %49 = arith.truncf %48 : vector<8x32xf32> to vector<8x32xbf16>
      %c0_32 = arith.constant 0 : index
      %c0_33 = arith.constant 0 : index
      %c0_34 = arith.constant 0 : index
      %50 = vector.load %arg6[%c0_32, %c0_33, %c0_34] : memref<1x32x16xbf16, #tpu.memory_space<vmem>>, vector<1x32x16xbf16>
      %51 = vector.shape_cast %50 : vector<1x32x16xbf16> to vector<32x16xbf16>
      %cst_35 = arith.constant dense<0.000000e+00> : vector<8x16xf32>
      %52 = tpu.matmul %49, %51, %cst_35 {dimension_numbers = #tpu.dot_dimension_numbers<[1], [0], [0], [1], [0, 0, 1, 1], [], []>} : vector<8x32xbf16>, vector<32x16xbf16>, vector<8x16xf32> -> vector<8x16xf32>
      %53 = arith.truncf %52 : vector<8x16xf32> to vector<8x16xbf16>
      %54 = arith.index_cast %arg2 : i32 to index
      %c0_36 = arith.constant 0 : index
      %c0_37 = arith.constant 0 : index
      %55 = vector.load %arg12[%54, %c0_36, %c0_37] : memref<4x8x16xbf16, #tpu.memory_space<vmem>>, vector<1x8x16xbf16>
      %56 = vector.shape_cast %55 : vector<1x8x16xbf16> to vector<8x16xbf16>
      %57 = vector.shape_cast %53 : vector<8x16xbf16> to vector<1x8x16xbf16>
      tpu.vector_store %arg12[%54, %c0_36, %c0_37], %57 {strides = array<i32>} : memref<4x8x16xbf16, #tpu.memory_space<vmem>>, vector<1x8x16xbf16>,
      %c0_38 = arith.constant 0 : index
      %c0_39 = arith.constant 0 : index
      %c0_40 = arith.constant 0 : index
      %58 = vector.load %arg7[%c0_38, %c0_39, %c0_40] : memref<1x32x16xbf16, #tpu.memory_space<vmem>>, vector<1x32x16xbf16>
      %59 = vector.shape_cast %58 : vector<1x32x16xbf16> to vector<32x16xbf16>
      %cst_41 = arith.constant dense<0.000000e+00> : vector<8x16xf32>
      %60 = tpu.matmul %49, %59, %cst_41 {dimension_numbers = #tpu.dot_dimension_numbers<[1], [0], [0], [1], [0, 0, 1, 1], [], []>} : vector<8x32xbf16>, vector<32x16xbf16>, vector<8x16xf32> -> vector<8x16xf32>
      %61 = arith.truncf %60 : vector<8x16xf32> to vector<8x16xbf16>
      %62 = arith.index_cast %arg2 : i32 to index
      %c0_42 = arith.constant 0 : index
      %c0_43 = arith.constant 0 : index
      %63 = vector.load %arg13[%62, %c0_42, %c0_43] : memref<4x8x16xbf16, #tpu.memory_space<vmem>>, vector<1x8x16xbf16>
      %64 = vector.shape_cast %63 : vector<1x8x16xbf16> to vector<8x16xbf16>
      %65 = vector.shape_cast %61 : vector<8x16xbf16> to vector<1x8x16xbf16>
      tpu.vector_store %arg13[%62, %c0_42, %c0_43], %65 {strides = array<i32>} : memref<4x8x16xbf16, #tpu.memory_space<vmem>>, vector<1x8x16xbf16>,
    } else {
    }
    %c0_i32_1 = arith.constant 0 : i32
    %3 = arith.cmpi eq, %arg2, %c0_i32_1 : i32
    %4 = arith.extui %3 : i1 to i32
    %c0_i32_2 = arith.constant 0 : i32
    %5 = arith.cmpi ne, %4, %c0_i32_2 : i32
    scf.if %5 {
      %cst_29 = arith.constant 0.000000e+00 : f32
      %47 = vector.broadcast %cst_29 : f32 to vector<8x32xf32>
      %c0_30 = arith.constant 0 : index
      %c0_31 = arith.constant 0 : index
      %48 = vector.load %arg14[%c0_30, %c0_31] : memref<8x32xf32, #tpu.memory_space<vmem>>, vector<8x32xf32>
      tpu.vector_store %arg14[%c0_30, %c0_31], %47 {strides = array<i32>} : memref<8x32xf32, #tpu.memory_space<vmem>>, vector<8x32xf32>,
    } else {
    }
    %c0 = arith.constant 0 : index
    %c0_3 = arith.constant 0 : index
    %c0_4 = arith.constant 0 : index
    %6 = vector.load %arg3[%c0, %c0_3, %c0_4] : memref<1x8x32xf32, #tpu.memory_space<vmem>>, vector<1x8x32xf32>
    %7 = vector.shape_cast %6 : vector<1x8x32xf32> to vector<8x32xf32>
    %8 = arith.truncf %7 : vector<8x32xf32> to vector<8x32xbf16>
    %c0_5 = arith.constant 0 : index
    %c0_6 = arith.constant 0 : index
    %c0_7 = arith.constant 0 : index
    %9 = vector.load %arg5[%c0_5, %c0_6, %c0_7] : memref<1x32x16xbf16, #tpu.memory_space<vmem>>, vector<1x32x16xbf16>
    %10 = vector.shape_cast %9 : vector<1x32x16xbf16> to vector<32x16xbf16>
    %cst = arith.constant dense<0.000000e+00> : vector<8x16xf32>
    %11 = tpu.matmul %8, %10, %cst {dimension_numbers = #tpu.dot_dimension_numbers<[1], [0], [0], [1], [0, 0, 1, 1], [], []>} : vector<8x32xbf16>, vector<32x16xbf16>, vector<8x16xf32> -> vector<8x16xf32>
    %12 = arith.truncf %11 : vector<8x16xf32> to vector<8x16xbf16>
    %13 = arith.index_cast %arg2 : i32 to index
    %c0_8 = arith.constant 0 : index
    %c0_9 = arith.constant 0 : index
    %14 = vector.load %arg12[%13, %c0_8, %c0_9] : memref<4x8x16xbf16, #tpu.memory_space<vmem>>, vector<1x8x16xbf16>
    %15 = vector.shape_cast %14 : vector<1x8x16xbf16> to vector<8x16xbf16>
    %16 = arith.index_cast %arg2 : i32 to index
    %c0_10 = arith.constant 0 : index
    %c0_11 = arith.constant 0 : index
    %17 = vector.load %arg13[%16, %c0_10, %c0_11] : memref<4x8x16xbf16, #tpu.memory_space<vmem>>, vector<1x8x16xbf16>
    %18 = vector.shape_cast %17 : vector<1x8x16xbf16> to vector<8x16xbf16>
    %cst_12 = arith.constant dense<0.000000e+00> : vector<8x8xf32>
    %19 = tpu.matmul %12, %15, %cst_12 {dimension_numbers = #tpu.dot_dimension_numbers<[1], [1], [0], [0], [0, 0, 1, 0], [], []>} : vector<8x16xbf16>, vector<8x16xbf16>, vector<8x8xf32> -> vector<8x8xf32>
    %cst_13 = arith.constant 2.500000e-01 : f32
    %20 = vector.broadcast %cst_13 : f32 to vector<8x8xf32>
    %21 = arith.mulf %19, %20 : vector<8x8xf32>
    %c0_14 = arith.constant 0 : index
    %c0_15 = arith.constant 0 : index
    %c0_16 = arith.constant 0 : index
    %22 = vector.load %arg10[%c0_14, %c0_15, %c0_16] : memref<1x8x8xf32, #tpu.memory_space<vmem>>, vector<1x8x8xf32>
    %23 = vector.shape_cast %22 : vector<1x8x8xf32> to vector<8x8xf32>
    %24 = arith.addf %21, %23 : vector<8x8xf32>
    %cst_17 = arith.constant dense<0xFF800000> : vector<8xf32>
    %25 = vector.multi_reduction <maximumf>, %24, %cst_17 [1] : vector<8x8xf32> to vector<8xf32>
    %26 = vector.shape_cast %25 : vector<8xf32> to vector<8x1xf32>
    %27 = vector.broadcast %26 : vector<8x1xf32> to vector<8x8xf32>
    %28 = arith.subf %24, %27 : vector<8x8xf32>
    %29 = math.exp %28 : vector<8x8xf32>
    %cst_18 = arith.constant dense<0.000000e+00> : vector<8xf32>
    %30 = vector.multi_reduction <add>, %29, %cst_18 [1] : vector<8x8xf32> to vector<8xf32>
    %31 = vector.shape_cast %30 : vector<8xf32> to vector<8x1xf32>
    %32 = tpu.reciprocal %31 {approx = true} : vector<8x1xf32> -> vector<8x1xf32>
    %33 = vector.broadcast %32 : vector<8x1xf32> to vector<8x8xf32>
    %34 = arith.mulf %29, %33 : vector<8x8xf32>
    %35 = arith.truncf %34 : vector<8x8xf32> to vector<8x8xbf16>
    %cst_19 = arith.constant dense<0.000000e+00> : vector<8x16xf32>
    %36 = tpu.matmul %35, %18, %cst_19 {dimension_numbers = #tpu.dot_dimension_numbers<[1], [0], [0], [1], [0, 0, 1, 1], [], []>} : vector<8x8xbf16>, vector<8x16xbf16>, vector<8x16xf32> -> vector<8x16xf32>
    %c0_20 = arith.constant 0 : index
    %c0_21 = arith.constant 0 : index
    %37 = vector.load %arg14[%c0_20, %c0_21] : memref<8x32xf32, #tpu.memory_space<vmem>>, vector<8x32xf32>
    %38 = arith.truncf %36 : vector<8x16xf32> to vector<8x16xbf16>
    %c0_22 = arith.constant 0 : index
    %c0_23 = arith.constant 0 : index
    %c0_24 = arith.constant 0 : index
    %39 = vector.load %arg8[%c0_22, %c0_23, %c0_24] : memref<1x16x32xbf16, #tpu.memory_space<vmem>>, vector<1x16x32xbf16>
    %40 = vector.shape_cast %39 : vector<1x16x32xbf16> to vector<16x32xbf16>
    %cst_25 = arith.constant dense<0.000000e+00> : vector<8x32xf32>
    %41 = tpu.matmul %38, %40, %cst_25 {dimension_numbers = #tpu.dot_dimension_numbers<[1], [0], [0], [1], [0, 0, 1, 1], [], []>} : vector<8x16xbf16>, vector<16x32xbf16>, vector<8x32xf32> -> vector<8x32xf32>
    %42 = arith.addf %37, %41 : vector<8x32xf32>
    %c0_26 = arith.constant 0 : index
    %c0_27 = arith.constant 0 : index
    %43 = vector.load %arg14[%c0_26, %c0_27] : memref<8x32xf32, #tpu.memory_space<vmem>>, vector<8x32xf32>
    tpu.vector_store %arg14[%c0_26, %c0_27], %42 {strides = array<i32>} : memref<8x32xf32, #tpu.memory_space<vmem>>, vector<8x32xf32>,
    %c3_i32 = arith.constant 3 : i32
    %44 = arith.cmpi eq, %arg2, %c3_i32 : i32
    %45 = arith.extui %44 : i1 to i32
    %c0_i32_28 = arith.constant 0 : i32
    %46 = arith.cmpi ne, %45, %c0_i32_28 : i32
    scf.if %46 {
      %c0_29 = arith.constant 0 : index
      %c0_30 = arith.constant 0 : index
      %47 = vector.load %arg14[%c0_29, %c0_30] : memref<8x32xf32, #tpu.memory_space<vmem>>, vector<8x32xf32>
      %c0_31 = arith.constant 0 : index
      %c0_32 = arith.constant 0 : index
      %48 = vector.load %arg9[%c0_31, %c0_32] : memref<1x32xf32, #tpu.memory_space<vmem>>, vector<1x32xf32>
      %49 = vector.broadcast %48 : vector<1x32xf32> to vector<8x32xf32>
      %50 = arith.addf %47, %49 : vector<8x32xf32>
      %c0_33 = arith.constant 0 : index
      %c0_34 = arith.constant 0 : index
      %c0_35 = arith.constant 0 : index
      %51 = vector.load %arg11[%c0_33, %c0_34, %c0_35] : memref<1x8x32xf32, #tpu.memory_space<vmem>>, vector<1x8x32xf32>
      %52 = vector.shape_cast %51 : vector<1x8x32xf32> to vector<8x32xf32>
      %53 = vector.shape_cast %50 : vector<8x32xf32> to vector<1x8x32xf32>
      tpu.vector_store %arg11[%c0_33, %c0_34, %c0_35], %53 {strides = array<i32>} : memref<1x8x32xf32, #tpu.memory_space<vmem>>, vector<1x8x32xf32>,
    } else {
    }
    return
  }
  func.func @transform_0(%arg0: i32, %arg1: i32, %arg2: i32) -> (i32, i32, i32) {
    %c0_i32 = arith.constant 0 : i32
    %c0_i32_0 = arith.constant 0 : i32
    return %arg0, %arg1, %c0_i32 : i32, i32, i32
  }
  func.func @transform_1(%arg0: i32, %arg1: i32, %arg2: i32) -> (i32, i32, i32) {
    %c0_i32 = arith.constant 0 : i32
    %c0_i32_0 = arith.constant 0 : i32
    %c0_i32_1 = arith.constant 0 : i32
    return %arg0, %c0_i32, %c0_i32_0 : i32, i32, i32
  }
  func.func @transform_2(%arg0: i32, %arg1: i32, %arg2: i32) -> (i32, i32, i32) {
    %c0_i32 = arith.constant 0 : i32
    %c0_i32_0 = arith.constant 0 : i32
    %c0_i32_1 = arith.constant 0 : i32
    return %arg2, %c0_i32, %c0_i32_0 : i32, i32, i32
  }
  func.func @transform_3(%arg0: i32, %arg1: i32, %arg2: i32) -> (i32, i32, i32) {
    %c0_i32 = arith.constant 0 : i32
    %c0_i32_0 = arith.constant 0 : i32
    %c0_i32_1 = arith.constant 0 : i32
    return %arg2, %c0_i32, %c0_i32_0 : i32, i32, i32
  }
  func.func @transform_4(%arg0: i32, %arg1: i32, %arg2: i32) -> (i32, i32, i32) {
    %c0_i32 = arith.constant 0 : i32
    %c0_i32_0 = arith.constant 0 : i32
    %c0_i32_1 = arith.constant 0 : i32
    return %arg2, %c0_i32, %c0_i32_0 : i32, i32, i32
  }
  func.func @transform_5(%arg0: i32, %arg1: i32, %arg2: i32) -> (i32, i32, i32) {
    %c0_i32 = arith.constant 0 : i32
    %c0_i32_0 = arith.constant 0 : i32
    %c0_i32_1 = arith.constant 0 : i32
    return %arg2, %c0_i32, %c0_i32_0 : i32, i32, i32
  }
  func.func @transform_6(%arg0: i32, %arg1: i32, %arg2: i32) -> (i32, i32) {
    %c0_i32 = arith.constant 0 : i32
    %c0_i32_0 = arith.constant 0 : i32
    %c0_i32_1 = arith.constant 0 : i32
    return %c0_i32, %c0_i32_0 : i32, i32
  }
  func.func @transform_7(%arg0: i32, %arg1: i32, %arg2: i32) -> (i32, i32, i32) {
    %c0_i32 = arith.constant 0 : i32
    %c0_i32_0 = arith.constant 0 : i32
    return %arg2, %arg1, %c0_i32 : i32, i32, i32
  }
  func.func @transform_8(%arg0: i32, %arg1: i32, %arg2: i32) -> (i32, i32, i32) {
    %c0_i32 = arith.constant 0 : i32
    %c0_i32_0 = arith.constant 0 : i32
    return %arg0, %arg1, %c0_i32 : i32, i32, i32
  }
}

</mosaic_0001>

<llo_original>
// kernel: tpu_custom_call.1
$region0: #{tpu_custom_call.1}
  #allocation0 [shape = 'u32[]', space=smem, size = 0x4, offset = 0x4, fixed_abs, tag = 'smem constant byte address 0x4 - core index']
  #allocation1 [shape = 'u32[144,128]{1,0:T(1,128)}', space=vmem, size = 0x12000, scoped, tag = 'internal scratch']
  #allocation2 [shape = 'bf16[4,8,16]{2,1,0:T(8,128)(2,1)}', space=vmem, size = 0x2000, scoped, tag = 'scratch operand']
  #allocation3 [shape = 'bf16[4,8,16]{2,1,0:T(8,128)(2,1)}', space=vmem, size = 0x2000, scoped, tag = 'scratch operand']
  #allocation4 [shape = 'f32[8,32]{1,0:T(8,128)}', space=vmem, size = 0x1000, scoped, tag = 'scratch operand']
  %s0 = inlined_call_operand.hbm [shape: f32[2,8,32], index: 0, kind: input, shape index: {}]
  %s1 = inlined_call_operand.hbm [shape: f32[2,8,32], index: 1, kind: input, shape index: {}]
  %s2 = inlined_call_operand.hbm [shape: bf16[4,32,16], index: 2, kind: input, shape index: {}]
  %s3 = inlined_call_operand.hbm [shape: bf16[4,32,16], index: 3, kind: input, shape index: {}]
  %s4 = inlined_call_operand.hbm [shape: bf16[4,32,16], index: 4, kind: input, shape index: {}]
  %s5 = inlined_call_operand.hbm [shape: bf16[4,16,32], index: 5, kind: input, shape index: {}]
  %s6 = inlined_call_operand.hbm [shape: f32[1,32], index: 6, kind: input, shape index: {}]
  %s7 = inlined_call_operand.hbm [shape: f32[4,8,8], index: 7, kind: input, shape index: {}]
  %s8 = inlined_call_operand.hbm [shape: f32[2,8,32], index: 8, kind: output, shape index: {}]
  %s9 = sld [smem:[#allocation0]]
  $region109: #{tpu_custom_call.1} parent=0
    _
  %s11 = ssub.s32 1, %s9
  %s12 = scalar_select 0, %s11, %s9
  $region1: #{tpu_custom_call.1} parent=0
    #allocation5 [shape = 'u8[8192]{0}', space=vmem, size = 0x2000, scoped, tag = 'input window, operand 0']
    #allocation6 [shape = 's32[2]{0}', space=sflag, size = 0x8, scoped, tag = 'scoped memory for tpu_custom_call.1']
    #allocation7 [shape = 's32[2]{0}', space=sflag, size = 0x8, scoped, tag = 'scoped memory for tpu_custom_call.1']
    #allocation8 [shape = 'u8[8192]{0}', space=vmem, size = 0x2000, scoped, tag = 'input window, operand 1']
    #allocation9 [shape = 's32[2]{0}', space=sflag, size = 0x8, scoped, tag = 'scoped memory for tpu_custom_call.1']
    #allocation10 [shape = 'u8[16384]{0}', space=vmem, size = 0x4000, scoped, tag = 'input window, operand 2']
    #allocation11 [shape = 'u8[16384]{0}', space=vmem, size = 0x4000, scoped, tag = 'input window, operand 3']
    #allocation12 [shape = 's32[2]{0}', space=sflag, size = 0x8, scoped, tag = 'scoped memory for tpu_custom_call.1']
    #allocation13 [shape = 'u8[16384]{0}', space=vmem, size = 0x4000, scoped, tag = 'input window, operand 4']
    #allocation14 [shape = 'u8[8192]{0}', space=vmem, size = 0x2000, scoped, tag = 'input window, operand 5']
    #allocation15 [shape = 's32[2]{0}', space=sflag, size = 0x8, scoped, tag = 'scoped memory for tpu_custom_call.1']
    #allocation16 [shape = 'u8[512]{0}', space=vmem, size = 0x400, scoped, tag = 'input window, operand 6, single buffered']
    #allocation17 [shape = 'u8[8192]{0}', space=vmem, size = 0x2000, scoped, tag = 'input window, operand 7']
    #allocation18 [shape = 's32[2]{0}', space=sflag, size = 0x8, scoped, tag = 'scoped memory for tpu_custom_call.1']
    #allocation19 [shape = 'u8[8192]{0}', space=vmem, size = 0x2000, scoped, tag = 'output window, operand 0']
    %13 = vsyncpa [#allocation6], 0
    %s14 = scalar_lea.sflag [#allocation6], 1
    %15 = vsyncpa %s14, 0
    %16 = vsyncpa [#allocation9], 0
    %s17 = scalar_lea.sflag [#allocation9], 1
    %18 = vsyncpa %s17, 0
    %19 = vsyncpa [#allocation12], 0
    %s20 = scalar_lea.sflag [#allocation12], 1
    %21 = vsyncpa %s20, 0
    %22 = vsyncpa [#allocation15], 0
    %s23 = scalar_lea.sflag [#allocation15], 1
    %24 = vsyncpa %s23, 0
    %25 = vsyncpa [#allocation18], 0
    %s26 = scalar_lea.sflag [#allocation18], 1
    %27 = vsyncpa %s26, 0
    %28 = vsyncpa [#allocation7], 0
    %s29 = scalar_lea.sflag [#allocation7], 1
    %30 = vsyncpa %s29, 0
    loop: start=0, step=1, limit=10
    $region2: #{tpu_custom_call.1} parent=1 // loop_pre_header
      _
    $region3: #{tpu_custom_call.1} parent=1 // loop_header
      %s32 = sphi 0, %s36
      %p33 = scmp.ge.s32.totalorder %s32, 10
      %s39 = sphi 0, %s58
      %s40 = sphi 0, %s54
      %s41 = sphi 0, %s50
      %s42 = sphi 0, %s39
      %s43 = sphi 0, %s40
      %s44 = sphi 0, %s41
      %s45 = sphi 0, %s42
      %s46 = sphi 0, %s43
      %s47 = sphi 0, %s44
      %s63 = sphi 0, %s65
      %s66 = sphi 0, %s63
      %s67 = sphi 0, %s66
      %s83 = sphi 0, %s67
      %s89 = sphi 0, %s91
      %s92 = sphi 0, %s89
      %s93 = sphi 0, %s92
      %s109 = sphi 0, %s93
      %s115 = sphi 0, %s117
      %s118 = sphi 0, %s115
      %s119 = sphi 0, %s118
      %s135 = sphi 0, %s119
      %s141 = sphi 0, %s143
      %s144 = sphi 0, %s141
      %s145 = sphi 0, %s144
      %s161 = sphi 0, %s145
      %s167 = sphi 0, %s169
      %s170 = sphi 0, %s167
      %s171 = sphi 0, %s170
      %s187 = sphi 0, %s171
      %s193 = sphi 0, %s195
      %s196 = sphi 0, %s193
      %s197 = sphi 0, %s196
      %s213 = sphi 0, %s197
      %s217 = sphi 0, %s217
      %s219 = sphi 0, %s217
      %s220 = sphi 0, %s219
      %s234 = sphi 0, %s220
      %s242 = sphi 0, %s244
      %s245 = sphi 0, %s242
      %s246 = sphi 0, %s245
      %s262 = sphi 0, %s246
      %s270 = sphi 0, %s272
      %s273 = sphi 0, %s270
      %s274 = sphi 0, %s273
      %s290 = sphi 0, %s274
    $region4: #{tpu_custom_call.1} parent=1 // loop_header_branch
      %35 = sbr.rel (%p33) target = $region8
    $region5: #{tpu_custom_call.1} parent=1 // loop_body
      %s37 = ssub.s32 %s32, 1
      %s38 = ssub.s32 %s32, 2
      %s48 = sadd.s32 1, %s41
      %p49 = scmp.ge.s32.totalorder %s48, 4
      %s50 = scalar_select %p49, 0, %s48
      %s51 = sadd.s32 1, %s40
      %s52 = scalar_select %p49, %s51, %s40
      %p53 = scmp.ge.s32.totalorder %s52, 1
      %s54 = scalar_select %p53, 0, %s52
      %s55 = sadd.s32 1, %s39
      %s56 = scalar_select %p53, %s55, %s39
      %p57 = scmp.ge.s32.totalorder %s56, 2
      %s58 = scalar_select %p57, 0, %s56
      %s59 = ssub.s32 %s39, %s58
      %s60 = ssub.s32 %s40, %s54
      %s61 = sor.u32 %s59, %s60
      %p62 = scmp.eq.s32.totalorder %s61, 0
      %s64 = sadd.s32 %s63, 1
      %s65 = scalar_select %p62, %s63, %s64
      %p68 = pneg %p62
      %p69 = scmp.eq.s32.totalorder %s32, 7
      %p70 = por %p68, %p69
      %p71 = scmp.ne.s32.totalorder %s63, %s66
      %p72 = scmp.eq.s32.totalorder %s32, 0
      %p73 = por %p71, %p72
      %p74 = scmp.ne.s32.totalorder %s63, %s66
      %p75 = scmp.eq.s32.totalorder %s37, 7
      %p76 = por %p74, %p75
      %p77 = scmp.ne.s32.totalorder %s66, %s67
      %p78 = scmp.eq.s32.totalorder %s37, 0
      %p79 = por %p77, %p78
      %p80 = scmp.ne.s32.totalorder %s66, %s67
      %p81 = scmp.eq.s32.totalorder %s38, 7
      %p82 = por %p80, %p81
      %p84 = scmp.ne.s32.totalorder %s67, %s83
      %p85 = scmp.eq.s32.totalorder %s38, 0
      %p86 = por %p84, %p85
      %s87 = ssub.s32 %s39, %s58
      %p88 = scmp.eq.s32.totalorder %s87, 0
      %s90 = sadd.s32 %s89, 1
      %s91 = scalar_select %p88, %s89, %s90
      %p94 = pneg %p88
      %p95 = scmp.eq.s32.totalorder %s32, 7
      %p96 = por %p94, %p95
      %p97 = scmp.ne.s32.totalorder %s89, %s92
      %p98 = scmp.eq.s32.totalorder %s32, 0
      %p99 = por %p97, %p98
      %p100 = scmp.ne.s32.totalorder %s89, %s92
      %p101 = scmp.eq.s32.totalorder %s37, 7
      %p102 = por %p100, %p101
      %p103 = scmp.ne.s32.totalorder %s92, %s93
      %p104 = scmp.eq.s32.totalorder %s37, 0
      %p105 = por %p103, %p104
      %p106 = scmp.ne.s32.totalorder %s92, %s93
      %p107 = scmp.eq.s32.totalorder %s38, 7
      %p108 = por %p106, %p107
      %p110 = scmp.ne.s32.totalorder %s93, %s109
      %p111 = scmp.eq.s32.totalorder %s38, 0
      %p112 = por %p110, %p111
      %s113 = ssub.s32 %s41, %s50
      %p114 = scmp.eq.s32.totalorder %s113, 0
      %s116 = sadd.s32 %s115, 1
      %s117 = scalar_select %p114, %s115, %s116
      %p120 = pneg %p114
      %p121 = scmp.eq.s32.totalorder %s32, 7
      %p122 = por %p120, %p121
      %p123 = scmp.ne.s32.totalorder %s115, %s118
      %p124 = scmp.eq.s32.totalorder %s32, 0
      %p125 = por %p123, %p124
      %p126 = scmp.ne.s32.totalorder %s115, %s118
      %p127 = scmp.eq.s32.totalorder %s37, 7
      %p128 = por %p126, %p127
      %p129 = scmp.ne.s32.totalorder %s118, %s119
      %p130 = scmp.eq.s32.totalorder %s37, 0
      %p131 = por %p129, %p130
      %p132 = scmp.ne.s32.totalorder %s118, %s119
      %p133 = scmp.eq.s32.totalorder %s38, 7
      %p134 = por %p132, %p133
      %p136 = scmp.ne.s32.totalorder %s119, %s135
      %p137 = scmp.eq.s32.totalorder %s38, 0
      %p138 = por %p136, %p137
      %s139 = ssub.s32 %s41, %s50
      %p140 = scmp.eq.s32.totalorder %s139, 0
      %s142 = sadd.s32 %s141, 1
      %s143 = scalar_select %p140, %s141, %s142
      %p146 = pneg %p140
      %p147 = scmp.eq.s32.totalorder %s32, 7
      %p148 = por %p146, %p147
      %p149 = scmp.ne.s32.totalorder %s141, %s144
      %p150 = scmp.eq.s32.totalorder %s32, 0
      %p151 = por %p149, %p150
      %p152 = scmp.ne.s32.totalorder %s141, %s144
      %p153 = scmp.eq.s32.totalorder %s37, 7
      %p154 = por %p152, %p153
      %p155 = scmp.ne.s32.totalorder %s144, %s145
      %p156 = scmp.eq.s32.totalorder %s37, 0
      %p157 = por %p155, %p156
      %p158 = scmp.ne.s32.totalorder %s144, %s145
      %p159 = scmp.eq.s32.totalorder %s38, 7
      %p160 = por %p158, %p159
      %p162 = scmp.ne.s32.totalorder %s145, %s161
      %p163 = scmp.eq.s32.totalorder %s38, 0
      %p164 = por %p162, %p163
      %s165 = ssub.s32 %s41, %s50
      %p166 = scmp.eq.s32.totalorder %s165, 0
      %s168 = sadd.s32 %s167, 1
      %s169 = scalar_select %p166, %s167, %s168
      %p172 = pneg %p166
      %p173 = scmp.eq.s32.totalorder %s32, 7
      %p174 = por %p172, %p173
      %p175 = scmp.ne.s32.totalorder %s167, %s170
      %p176 = scmp.eq.s32.totalorder %s32, 0
      %p177 = por %p175, %p176
      %p178 = scmp.ne.s32.totalorder %s167, %s170
      %p179 = scmp.eq.s32.totalorder %s37, 7
      %p180 = por %p178, %p179
      %p181 = scmp.ne.s32.totalorder %s170, %s171
      %p182 = scmp.eq.s32.totalorder %s37, 0
      %p183 = por %p181, %p182
      %p184 = scmp.ne.s32.totalorder %s170, %s171
      %p185 = scmp.eq.s32.totalorder %s38, 7
      %p186 = por %p184, %p185
      %p188 = scmp.ne.s32.totalorder %s171, %s187
      %p189 = scmp.eq.s32.totalorder %s38, 0
      %p190 = por %p188, %p189
      %s191 = ssub.s32 %s41, %s50
      %p192 = scmp.eq.s32.totalorder %s191, 0
      %s194 = sadd.s32 %s193, 1
      %s195 = scalar_select %p192, %s193, %s194
      %p198 = pneg %p192
      %p199 = scmp.eq.s32.totalorder %s32, 7
      %p200 = por %p198, %p199
      %p201 = scmp.ne.s32.totalorder %s193, %s196
      %p202 = scmp.eq.s32.totalorder %s32, 0
      %p203 = por %p201, %p202
      %p204 = scmp.ne.s32.totalorder %s193, %s196
      %p205 = scmp.eq.s32.totalorder %s37, 7
      %p206 = por %p204, %p205
      %p207 = scmp.ne.s32.totalorder %s196, %s197
      %p208 = scmp.eq.s32.totalorder %s37, 0
      %p209 = por %p207, %p208
      %p210 = scmp.ne.s32.totalorder %s196, %s197
      %p211 = scmp.eq.s32.totalorder %s38, 7
      %p212 = por %p210, %p211
      %p214 = scmp.ne.s32.totalorder %s197, %s213
      %p215 = scmp.eq.s32.totalorder %s38, 0
      %p216 = por %p214, %p215
      %s218 = sadd.s32 %s217, 1
      %p221 = scmp.eq.s32.totalorder %s32, 7
      %p222 = scmp.ne.s32.totalorder %s217, %s219
      %p223 = scmp.eq.s32.totalorder %s32, 0
      %p224 = por %p222, %p223
      %p225 = scmp.ne.s32.totalorder %s217, %s219
      %p226 = scmp.eq.s32.totalorder %s37, 7
      %p227 = por %p225, %p226
      %p228 = scmp.ne.s32.totalorder %s219, %s220
      %p229 = scmp.eq.s32.totalorder %s37, 0
      %p230 = por %p228, %p229
      %p231 = scmp.ne.s32.totalorder %s219, %s220
      %p232 = scmp.eq.s32.totalorder %s38, 7
      %p233 = por %p231, %p232
      %p235 = scmp.ne.s32.totalorder %s220, %s234
      %p236 = scmp.eq.s32.totalorder %s38, 0
      %p237 = por %p235, %p236
      %s238 = ssub.s32 %s41, %s50
      %s239 = ssub.s32 %s40, %s54
      %s240 = sor.u32 %s238, %s239
      %p241 = scmp.eq.s32.totalorder %s240, 0
      %s243 = sadd.s32 %s242, 1
      %s244 = scalar_select %p241, %s242, %s243
      %p247 = pneg %p241
      %p248 = scmp.eq.s32.totalorder %s32, 7
      %p249 = por %p247, %p248
      %p250 = scmp.ne.s32.totalorder %s242, %s245
      %p251 = scmp.eq.s32.totalorder %s32, 0
      %p252 = por %p250, %p251
      %p253 = scmp.ne.s32.totalorder %s242, %s245
      %p254 = scmp.eq.s32.totalorder %s37, 7
      %p255 = por %p253, %p254
      %p256 = scmp.ne.s32.totalorder %s245, %s246
      %p257 = scmp.eq.s32.totalorder %s37, 0
      %p258 = por %p256, %p257
      %p259 = scmp.ne.s32.totalorder %s245, %s246
      %p260 = scmp.eq.s32.totalorder %s38, 7
      %p261 = por %p259, %p260
      %p263 = scmp.ne.s32.totalorder %s246, %s262
      %p264 = scmp.eq.s32.totalorder %s38, 0
      %p265 = por %p263, %p264
      %s266 = ssub.s32 %s39, %s58
      %s267 = ssub.s32 %s40, %s54
      %s268 = sor.u32 %s266, %s267
      %p269 = scmp.eq.s32.totalorder %s268, 0
      %s271 = sadd.s32 %s270, 1
      %s272 = scalar_select %p269, %s270, %s271
      %p275 = pneg %p269
      %p276 = scmp.eq.s32.totalorder %s32, 7
      %p277 = por %p275, %p276
      %p278 = scmp.ne.s32.totalorder %s270, %s273
      %p279 = scmp.eq.s32.totalorder %s32, 0
      %p280 = por %p278, %p279
      %p281 = scmp.ne.s32.totalorder %s270, %s273
      %p282 = scmp.eq.s32.totalorder %s37, 7
      %p283 = por %p281, %p282
      %p284 = scmp.ne.s32.totalorder %s273, %s274
      %p285 = scmp.eq.s32.totalorder %s37, 0
      %p286 = por %p284, %p285
      %p287 = scmp.ne.s32.totalorder %s273, %s274
      %p288 = scmp.eq.s32.totalorder %s38, 7
      %p289 = por %p287, %p288
      %p291 = scmp.ne.s32.totalorder %s274, %s290
      %p292 = scmp.eq.s32.totalorder %s38, 0
      %p293 = por %p291, %p292
      %p294 = scmp.le.s32.totalorder 1, %s32
      %p295 = scmp.lt.s32.totalorder %s32, 9
      %p296 = pnand %p294, %p295
      %p297 = pneg %p296
      // Predicated region
      $region9: #{tpu_custom_call.1} parent=5 // pred_check
        _
      $region10: #{tpu_custom_call.1} parent=5 // pred_check_branch
        %299 = sbr.rel (%p296) target = $region12
      $region11: #{tpu_custom_call.1} parent=5 // pred_region
        %s300 = ssub.s32 %s32, 1
        // Predicated region
        $region13: #{tpu_custom_call.1} parent=11 // pred_check
          %p301 = pneg %p230
        $region14: #{tpu_custom_call.1} parent=11 // pred_check_branch
          %303 = sbr.rel (%p301) target = $region16
        $region15: #{tpu_custom_call.1} parent=11 // pred_region
          %s305 = ssub.s32 16, 16
          %306 = vsyncadd [#allocation15], %s305
          %s308 = sshll.u32 [#allocation16], 4
          %s309 = int_to_ptr.vmem [resolvable:$true] %s308
          %311 = dma.hbm_to_vmem [thread:$0]  %s6, 16, %s309, [#allocation15]
        $region16: #{tpu_custom_call.1} parent=11 // pred_fallthru
          _
      $region12: #{tpu_custom_call.1} parent=5 // pred_fallthru
        _
      %p312 = scmp.lt.s32.totalorder %s32, 8
      // Predicated region
      $region17: #{tpu_custom_call.1} parent=5 // pred_check
        %p313 = pneg %p312
      $region18: #{tpu_custom_call.1} parent=5 // pred_check_branch
        %315 = sbr.rel (%p313) target = $region20
      $region19: #{tpu_custom_call.1} parent=5 // pred_region
        // Predicated region
        $region21: #{tpu_custom_call.1} parent=19 // pred_check
          %p316 = pneg %p73
        $region22: #{tpu_custom_call.1} parent=19 // pred_check_branch
          %318 = sbr.rel (%p316) target = $region24
        $region23: #{tpu_custom_call.1} parent=19 // pred_region
          %s319 = sand.u32 %s63, 1
          %s320 = scalar_lea.sflag [#allocation6], %s319
          %s321 = sand.u32 %s63, 1
          %s322 = smul.addr %s321, 8
          %s323 = scalar_lea.vmem [#allocation5], %s322
          %s325 = ssub.s32 128, 128
          %326 = vsyncadd %s320, %s325
          %s327 = sadd.s32 %s40, %s39
          %s328 = smul.addr %s327, 128
          %s329 = scalar_lea.hbm %s0, %s328
          %s331 = sshll.u32 %s323, 4
          %s332 = int_to_ptr.vmem [resolvable:$true] %s331
          %334 = dma.hbm_to_vmem [thread:$0]  %s329, 128, %s332, %s320
        $region24: #{tpu_custom_call.1} parent=19 // pred_fallthru
          _
        // Predicated region
        $region25: #{tpu_custom_call.1} parent=19 // pred_check
          %p335 = pneg %p99
        $region26: #{tpu_custom_call.1} parent=19 // pred_check_branch
          %337 = sbr.rel (%p335) target = $region28
        $region27: #{tpu_custom_call.1} parent=19 // pred_region
          %s338 = sand.u32 %s32, 1
          %s339 = scalar_lea.sflag [#allocation9], %s338
          %s340 = sand.u32 %s89, 1
          %s341 = smul.addr %s340, 8
          %s342 = scalar_lea.vmem [#allocation8], %s341
          %s344 = ssub.s32 128, 128
          %345 = vsyncadd %s339, %s344
          %s346 = smul.addr %s39, 128
          %s347 = scalar_lea.hbm %s1, %s346
          %s349 = sshll.u32 %s342, 4
          %s350 = int_to_ptr.vmem [resolvable:$true] %s349
          %352 = dma.hbm_to_vmem [thread:$0]  %s347, 128, %s350, %s339
        $region28: #{tpu_custom_call.1} parent=19 // pred_fallthru
          _
        // Predicated region
        $region29: #{tpu_custom_call.1} parent=19 // pred_check
          %p353 = pneg %p125
        $region30: #{tpu_custom_call.1} parent=19 // pred_check_branch
          %355 = sbr.rel (%p353) target = $region32
        $region31: #{tpu_custom_call.1} parent=19 // pred_region
          %s356 = sand.u32 %s32, 1
          %s357 = scalar_lea.sflag [#allocation9], %s356
          %s358 = sand.u32 %s115, 1
          %s359 = smul.addr %s358, 16
          %s360 = scalar_lea.vmem [#allocation10], %s359
          %s362 = ssub.s32 256, 256
          %363 = vsyncadd %s357, %s362
          %s364 = smul.addr %s41, 4
          %s365 = smul.addr %s364, 64
          %s366 = scalar_lea.hbm %s2, %s365
          %s367 = sshll.u32 %s360, 4
          %s368 = int_to_ptr.vmem [resolvable:$true] %s367
          %373 = dma.hbm_to_vmem [thread:$0]  %s366, 256, %s368, %s357, 64, 64, 4
        $region32: #{tpu_custom_call.1} parent=19 // pred_fallthru
          _
        // Predicated region
        $region33: #{tpu_custom_call.1} parent=19 // pred_check
          %p374 = pneg %p151
        $region34: #{tpu_custom_call.1} parent=19 // pred_check_branch
          %376 = sbr.rel (%p374) target = $region36
        $region35: #{tpu_custom_call.1} parent=19 // pred_region
          %s377 = sand.u32 %s32, 1
          %s378 = scalar_lea.sflag [#allocation12], %s377
          %s379 = sand.u32 %s141, 1
          %s380 = smul.addr %s379, 16
          %s381 = scalar_lea.vmem [#allocation11], %s380
          %s383 = ssub.s32 256, 256
          %384 = vsyncadd %s378, %s383
          %s385 = smul.addr %s41, 4
          %s386 = smul.addr %s385, 64
          %s387 = scalar_lea.hbm %s3, %s386
          %s388 = sshll.u32 %s381, 4
          %s389 = int_to_ptr.vmem [resolvable:$true] %s388
          %394 = dma.hbm_to_vmem [thread:$0]  %s387, 256, %s389, %s378, 64, 64, 4
        $region36: #{tpu_custom_call.1} parent=19 // pred_fallthru
          _
        // Predicated region
        $region37: #{tpu_custom_call.1} parent=19 // pred_check
          %p395 = pneg %p177
        $region38: #{tpu_custom_call.1} parent=19 // pred_check_branch
          %397 = sbr.rel (%p395) target = $region40
        $region39: #{tpu_custom_call.1} parent=19 // pred_region
          %s398 = sand.u32 %s32, 1
          %s399 = scalar_lea.sflag [#allocation12], %s398
          %s400 = sand.u32 %s167, 1
          %s401 = smul.addr %s400, 16
          %s402 = scalar_lea.vmem [#allocation13], %s401
          %s404 = ssub.s32 256, 256
          %405 = vsyncadd %s399, %s404
          %s406 = smul.addr %s41, 4
          %s407 = smul.addr %s406, 64
          %s408 = scalar_lea.hbm %s4, %s407
          %s409 = sshll.u32 %s402, 4
          %s410 = int_to_ptr.vmem [resolvable:$true] %s409
          %415 = dma.hbm_to_vmem [thread:$0]  %s408, 256, %s410, %s399, 64, 64, 4
        $region40: #{tpu_custom_call.1} parent=19 // pred_fallthru
          _
        // Predicated region
        $region41: #{tpu_custom_call.1} parent=19 // pred_check
          %p416 = pneg %p203
        $region42: #{tpu_custom_call.1} parent=19 // pred_check_branch
          %418 = sbr.rel (%p416) target = $region44
        $region43: #{tpu_custom_call.1} parent=19 // pred_region
          %s419 = sand.u32 %s32, 1
          %s420 = scalar_lea.sflag [#allocation15], %s419
          %s421 = sand.u32 %s193, 1
          %s422 = smul.addr %s421, 8
          %s423 = scalar_lea.vmem [#allocation14], %s422
          %s425 = ssub.s32 128, 128
          %426 = vsyncadd %s420, %s425
          %s427 = smul.addr %s41, 2
          %s428 = smul.addr %s427, 64
          %s429 = scalar_lea.hbm %s5, %s428
          %s430 = sshll.u32 %s423, 4
          %s431 = int_to_ptr.vmem [resolvable:$true] %s430
          %436 = dma.hbm_to_vmem [thread:$0]  %s429, 128, %s431, %s420, 64, 64, 4
        $region44: #{tpu_custom_call.1} parent=19 // pred_fallthru
          _
        // Predicated region
        $region45: #{tpu_custom_call.1} parent=19 // pred_check
          %p437 = pneg %p252
        $region46: #{tpu_custom_call.1} parent=19 // pred_check_branch
          %439 = sbr.rel (%p437) target = $region48
        $region47: #{tpu_custom_call.1} parent=19 // pred_region
          %s440 = sand.u32 %s242, 1
          %s441 = scalar_lea.sflag [#allocation18], %s440
          %s442 = sand.u32 %s242, 1
          %s443 = smul.addr %s442, 8
          %s444 = scalar_lea.vmem [#allocation17], %s443
          %s446 = ssub.s32 128, 128
          %447 = vsyncadd %s441, %s446
          %s448 = sadd.s32 %s40, %s41
          %s449 = smul.addr %s448, 128
          %s450 = scalar_lea.hbm %s7, %s449
          %s452 = sshll.u32 %s444, 4
          %s453 = int_to_ptr.vmem [resolvable:$true] %s452
          %455 = dma.hbm_to_vmem [thread:$0]  %s450, 128, %s453, %s441
        $region48: #{tpu_custom_call.1} parent=19 // pred_fallthru
          _
      $region20: #{tpu_custom_call.1} parent=5 // pred_fallthru
        _
      %p456 = scmp.le.s32.totalorder 1, %s32
      %p457 = scmp.lt.s32.totalorder %s32, 9
      %p458 = pnand %p456, %p457
      %p459 = pneg %p458
      // Predicated region
      $region49: #{tpu_custom_call.1} parent=5 // pred_check
        _
      $region50: #{tpu_custom_call.1} parent=5 // pred_check_branch
        %461 = sbr.rel (%p458) target = $region52
      $region51: #{tpu_custom_call.1} parent=5 // pred_region
        %s462 = ssub.s32 %s32, 1
        %s463 = sand.u32 %s66, 1
        %s464 = scalar_lea.sflag [#allocation6], %s463
        %s465 = sand.u32 %s66, 1
        %s466 = smul.addr %s465, 8
        %s467 = scalar_lea.vmem [#allocation5], %s466
        // Predicated region
        $region53: #{tpu_custom_call.1} parent=51 // pred_check
          %p468 = pneg %p79
        $region54: #{tpu_custom_call.1} parent=51 // pred_check_branch
          %470 = sbr.rel (%p468) target = $region56
        $region55: #{tpu_custom_call.1} parent=51 // pred_region
          %471 = dma.done %s464, 128
        $region56: #{tpu_custom_call.1} parent=51 // pred_fallthru
          _
        %s472 = sand.u32 %s37, 1
        %s473 = scalar_lea.sflag [#allocation9], %s472
        %s474 = sand.u32 %s92, 1
        %s475 = smul.addr %s474, 8
        %s476 = scalar_lea.vmem [#allocation8], %s475
        // Predicated region
        $region57: #{tpu_custom_call.1} parent=51 // pred_check
          %p477 = pneg %p105
        $region58: #{tpu_custom_call.1} parent=51 // pred_check_branch
          %479 = sbr.rel (%p477) target = $region60
        $region59: #{tpu_custom_call.1} parent=51 // pred_region
          %480 = dma.done %s473, 128
        $region60: #{tpu_custom_call.1} parent=51 // pred_fallthru
          _
        %s481 = sand.u32 %s37, 1
        %s482 = scalar_lea.sflag [#allocation9], %s481
        %s483 = sand.u32 %s118, 1
        %s484 = smul.addr %s483, 16
        %s485 = scalar_lea.vmem [#allocation10], %s484
        // Predicated region
        $region61: #{tpu_custom_call.1} parent=51 // pred_check
          %p486 = pneg %p131
        $region62: #{tpu_custom_call.1} parent=51 // pred_check_branch
          %488 = sbr.rel (%p486) target = $region64
        $region63: #{tpu_custom_call.1} parent=51 // pred_region
          %489 = dma.done %s482, 256
        $region64: #{tpu_custom_call.1} parent=51 // pred_fallthru
          _
        %s490 = sand.u32 %s37, 1
        %s491 = scalar_lea.sflag [#allocation12], %s490
        %s492 = sand.u32 %s144, 1
        %s493 = smul.addr %s492, 16
        %s494 = scalar_lea.vmem [#allocation11], %s493
        // Predicated region
        $region65: #{tpu_custom_call.1} parent=51 // pred_check
          %p495 = pneg %p157
        $region66: #{tpu_custom_call.1} parent=51 // pred_check_branch
          %497 = sbr.rel (%p495) target = $region68
        $region67: #{tpu_custom_call.1} parent=51 // pred_region
          %498 = dma.done %s491, 256
        $region68: #{tpu_custom_call.1} parent=51 // pred_fallthru
          _
        %s499 = sand.u32 %s37, 1
        %s500 = scalar_lea.sflag [#allocation12], %s499
        %s501 = sand.u32 %s170, 1
        %s502 = smul.addr %s501, 16
        %s503 = scalar_lea.vmem [#allocation13], %s502
        // Predicated region
        $region69: #{tpu_custom_call.1} parent=51 // pred_check
          %p504 = pneg %p183
        $region70: #{tpu_custom_call.1} parent=51 // pred_check_branch
          %506 = sbr.rel (%p504) target = $region72
        $region71: #{tpu_custom_call.1} parent=51 // pred_region
          %507 = dma.done %s500, 256
        $region72: #{tpu_custom_call.1} parent=51 // pred_fallthru
          _
        %s508 = sand.u32 %s37, 1
        %s509 = scalar_lea.sflag [#allocation15], %s508
        %s510 = sand.u32 %s196, 1
        %s511 = smul.addr %s510, 8
        %s512 = scalar_lea.vmem [#allocation14], %s511
        // Predicated region
        $region73: #{tpu_custom_call.1} parent=51 // pred_check
          %p513 = pneg %p209
        $region74: #{tpu_custom_call.1} parent=51 // pred_check_branch
          %515 = sbr.rel (%p513) target = $region76
        $region75: #{tpu_custom_call.1} parent=51 // pred_region
          %516 = dma.done %s509, 128
        $region76: #{tpu_custom_call.1} parent=51 // pred_fallthru
          _
        // Predicated region
        $region77: #{tpu_custom_call.1} parent=51 // pred_check
          %p517 = pneg %p230
        $region78: #{tpu_custom_call.1} parent=51 // pred_check_branch
          %519 = sbr.rel (%p517) target = $region80
        $region79: #{tpu_custom_call.1} parent=51 // pred_region
          %520 = dma.done [#allocation15], 16
        $region80: #{tpu_custom_call.1} parent=51 // pred_fallthru
          _
        %s521 = sand.u32 %s245, 1
        %s522 = scalar_lea.sflag [#allocation18], %s521
        %s523 = sand.u32 %s245, 1
        %s524 = smul.addr %s523, 8
        %s525 = scalar_lea.vmem [#allocation17], %s524
        // Predicated region
        $region81: #{tpu_custom_call.1} parent=51 // pred_check
          %p526 = pneg %p258
        $region82: #{tpu_custom_call.1} parent=51 // pred_check_branch
          %528 = sbr.rel (%p526) target = $region84
        $region83: #{tpu_custom_call.1} parent=51 // pred_region
          %529 = dma.done %s522, 128
        $region84: #{tpu_custom_call.1} parent=51 // pred_fallthru
          _
        %s530 = sand.u32 %s66, 1
        %s531 = scalar_lea.sflag [#allocation6], %s530
        %s532 = sand.u32 %s66, 1
        %s533 = smul.addr %s532, 8
        %s534 = scalar_lea.vmem [#allocation5], %s533
        %p535 = pneg %p79
        %p536 = pneg %p76
        %s537 = sand.u32 %s37, 1
        %s538 = scalar_lea.sflag [#allocation9], %s537
        %s539 = sand.u32 %s92, 1
        %s540 = smul.addr %s539, 8
        %s541 = scalar_lea.vmem [#allocation8], %s540
        %p542 = pneg %p105
        %p543 = pneg %p102
        %s544 = sand.u32 %s37, 1
        %s545 = scalar_lea.sflag [#allocation9], %s544
        %s546 = sand.u32 %s118, 1
        %s547 = smul.addr %s546, 16
        %s548 = scalar_lea.vmem [#allocation10], %s547
        %p549 = pneg %p131
        %p550 = pneg %p128
        %s551 = sand.u32 %s37, 1
        %s552 = scalar_lea.sflag [#allocation12], %s551
        %s553 = sand.u32 %s144, 1
        %s554 = smul.addr %s553, 16
        %s555 = scalar_lea.vmem [#allocation11], %s554
        %p556 = pneg %p157
        %p557 = pneg %p154
        %s558 = sand.u32 %s37, 1
        %s559 = scalar_lea.sflag [#allocation12], %s558
        %s560 = sand.u32 %s170, 1
        %s561 = smul.addr %s560, 16
        %s562 = scalar_lea.vmem [#allocation13], %s561
        %p563 = pneg %p183
        %p564 = pneg %p180
        %s565 = sand.u32 %s37, 1
        %s566 = scalar_lea.sflag [#allocation15], %s565
        %s567 = sand.u32 %s196, 1
        %s568 = smul.addr %s567, 8
        %s569 = scalar_lea.vmem [#allocation14], %s568
        %p570 = pneg %p209
        %p571 = pneg %p206
        %p572 = pneg %p230
        %p573 = pneg %p227
        %s574 = sand.u32 %s245, 1
        %s575 = scalar_lea.sflag [#allocation18], %s574
        %s576 = sand.u32 %s245, 1
        %s577 = smul.addr %s576, 8
        %s578 = scalar_lea.vmem [#allocation17], %s577
        %p579 = pneg %p258
        %p580 = pneg %p255
        %p581 = pneg %p286
        %p582 = pneg %p283
        %s583 = sand.u32 %s273, 1
        %s584 = scalar_lea.sflag [#allocation7], %s583
        %s585 = sand.u32 %s273, 1
        %s586 = smul.addr %s585, 8
        %s587 = scalar_lea.vmem [#allocation19], %s586
        %p589 = scmp.eq.s32.totalorder %s43, 0
        // Predicated region
        $region85: #{tpu_custom_call.1} parent=51 // pred_check
          %p590 = pneg %p589
        $region86: #{tpu_custom_call.1} parent=51 // pred_check_branch
          %592 = sbr.rel (%p590) target = $region88
        $region87: #{tpu_custom_call.1} parent=51 // pred_region
          %v593 = vld [vmem:[%s476] sm:$0xff]
          %v594 = vpack.c.bf16 %v593, %v593
          %v595 = vld [vmem:[%s494] sm:$0xf]
          %v596 = vld [vmem:[%s494 + $0x4] sm:$0xf]
          %v597 = vld [vmem:[%s494 + $0x8] sm:$0xf]
          %v598 = vld [vmem:[%s494 + $0xc] sm:$0xf]
          %v603 = vunpack.c.l.b16 %v595
          %v604 = vunpack.c.l.b16 %v596
          %v605 = vunpack.c.l.b16 %v597
          %v606 = vunpack.c.l.b16 %v598
          %v607 = vpack.c.b16 %v604, %v603
          %v608 = vpack.c.b16 %v606, %v605
          %vm611 = vcmask 261120
          %v613 = vsel %vm611, %v594, 0
          %615 = vmatprep.subr.bf16.mxu0 0
          %616 = vmatpush1.bf16.msra.mxu0 %v607
          %617 = vmatprep.subr.bf16.mxu0 0
          %618 = vmatpush1.bf16.msra.mxu0 %v608
          %619 = vmatprep.subr.bf16.mxu0 0
          %620 = vmatpush1.bf16.msra.mxu0 0
          %621 = vmatprep.subr.bf16.mxu0 0
          %622 = vmatpush1.bf16.msra.mxu0 0
          %623 = vmatprep.subr.bf16.mxu0 0
          %624 = vmatpush1.bf16.msra.mxu0 0
          %625 = vmatprep.subr.bf16.mxu0 0
          %626 = vmatpush1.bf16.msra.mxu0 0
          %627 = vmatprep.subr.bf16.mxu0 0
          %628 = vmatpush1.bf16.msra.mxu0 0
          %629 = vmatprep.subr.bf16.mxu0 0
          %630 = vmatpush1.bf16.msra.mxu0 0
          %631 = vmatprep.subr.bf16.mxu0 0
          %632 = vmatpush1.bf16.msra.mxu0 0
          %633 = vmatprep.subr.bf16.mxu0 0
          %634 = vmatpush1.bf16.msra.mxu0 0
          %635 = vmatprep.subr.bf16.mxu0 0
          %636 = vmatpush1.bf16.msra.mxu0 0
          %637 = vmatprep.subr.bf16.mxu0 0
          %638 = vmatpush1.bf16.msra.mxu0 0
          %639 = vmatprep.subr.bf16.mxu0 0
          %640 = vmatpush1.bf16.msra.mxu0 0
          %641 = vmatprep.subr.bf16.mxu0 0
          %642 = vmatpush1.bf16.msra.mxu0 0
          %643 = vmatprep.subr.bf16.mxu0 0
          %644 = vmatpush1.bf16.msra.mxu0 0
          %645 = vmatprep.subr.bf16.mxu0 0
          %646 = vmatpush1.bf16.msra.mxu0 0
          %647 = vmatprep.mubr.bf16.mxu0 0
          %648 = vmatmul.mubr.bf16.gmra.mrb[0].mxu0 %v613
          %v649 = vpop.f32.mrb[0].mxu0
          %v650 = vadd.f32 0.0, %v649
          %v651 = vpop.f32.mrb[0].mxu0
          %v652 = vpop.f32.mrb[0].mxu0
          %v653 = vpop.f32.mrb[0].mxu0
          %654 = vdwg.mxu0
          %v655 = vpack.c.bf16 %v650, %v650
          %s656 = smul.addr %s44, 4
          %s657 = scalar_lea.vmem [#allocation2], %s656
          %vm658 = vcmask 125952
          %659 = vst.msk [vmem:[%s657] sm:$0xf] %vm658, %v655
          %v660 = vld [vmem:[%s503] sm:$0xf]
          %v661 = vld [vmem:[%s503 + $0x4] sm:$0xf]
          %v662 = vld [vmem:[%s503 + $0x8] sm:$0xf]
          %v663 = vld [vmem:[%s503 + $0xc] sm:$0xf]
          %v668 = vunpack.c.l.b16 %v660
          %v669 = vunpack.c.l.b16 %v661
          %v670 = vunpack.c.l.b16 %v662
          %v671 = vunpack.c.l.b16 %v663
          %v672 = vpack.c.b16 %v669, %v668
          %v673 = vpack.c.b16 %v671, %v670
          %676 = vmatprep.subr.bf16.mxu0 0
          %677 = vmatpush1.bf16.msra.mxu0 %v672
          %678 = vmatprep.subr.bf16.mxu0 0
          %679 = vmatpush1.bf16.msra.mxu0 %v673
          %680 = vmatprep.subr.bf16.mxu0 0
          %681 = vmatpush1.bf16.msra.mxu0 0
          %682 = vmatprep.subr.bf16.mxu0 0
          %683 = vmatpush1.bf16.msra.mxu0 0
          %684 = vmatprep.subr.bf16.mxu0 0
          %685 = vmatpush1.bf16.msra.mxu0 0
          %686 = vmatprep.subr.bf16.mxu0 0
          %687 = vmatpush1.bf16.msra.mxu0 0
          %688 = vmatprep.subr.bf16.mxu0 0
          %689 = vmatpush1.bf16.msra.mxu0 0
          %690 = vmatprep.subr.bf16.mxu0 0
          %691 = vmatpush1.bf16.msra.mxu0 0
          %692 = vmatprep.subr.bf16.mxu0 0
          %693 = vmatpush1.bf16.msra.mxu0 0
          %694 = vmatprep.subr.bf16.mxu0 0
          %695 = vmatpush1.bf16.msra.mxu0 0
          %696 = vmatprep.subr.bf16.mxu0 0
          %697 = vmatpush1.bf16.msra.mxu0 0
          %698 = vmatprep.subr.bf16.mxu0 0
          %699 = vmatpush1.bf16.msra.mxu0 0
          %700 = vmatprep.subr.bf16.mxu0 0
          %701 = vmatpush1.bf16.msra.mxu0 0
          %702 = vmatprep.subr.bf16.mxu0 0
          %703 = vmatpush1.bf16.msra.mxu0 0
          %704 = vmatprep.subr.bf16.mxu0 0
          %705 = vmatpush1.bf16.msra.mxu0 0
          %706 = vmatprep.subr.bf16.mxu0 0
          %707 = vmatpush1.bf16.msra.mxu0 0
          %708 = vmatprep.mubr.bf16.mxu0 0
          %709 = vmatmul.mubr.bf16.gmra.mrb[0].mxu0 %v613
          %v710 = vpop.f32.mrb[0].mxu0
          %v711 = vadd.f32 0.0, %v710
          %v712 = vpop.f32.mrb[0].mxu0
          %v713 = vpop.f32.mrb[0].mxu0
          %v714 = vpop.f32.mrb[0].mxu0
          %715 = vdwg.mxu0
          %v716 = vpack.c.bf16 %v711, %v711
          %s717 = smul.addr %s44, 4
          %s718 = scalar_lea.vmem [#allocation3], %s717
          %719 = vst.msk [vmem:[%s718] sm:$0xf] %vm658, %v716
        $region88: #{tpu_custom_call.1} parent=51 // pred_fallthru
          _
        %p720 = scmp.eq.s32.totalorder %s44, 0
        // Predicated region
        $region89: #{tpu_custom_call.1} parent=51 // pred_check
          %p721 = pneg %p720
        $region90: #{tpu_custom_call.1} parent=51 // pred_check_branch
          %723 = sbr.rel (%p721) target = $region92
        $region91: #{tpu_custom_call.1} parent=51 // pred_region
          %vm724 = vcmask 261120
          %725 = vst.msk [vmem:[#allocation4] sm:$0xff] %vm724, 0.0
        $region92: #{tpu_custom_call.1} parent=51 // pred_fallthru
          _
        %v726 = vld [vmem:[%s467] sm:$0xff]
        %v727 = vpack.c.bf16 %v726, %v726
        %v728 = vld [vmem:[%s485] sm:$0xf]
        %v729 = vld [vmem:[%s485 + $0x4] sm:$0xf]
        %v730 = vld [vmem:[%s485 + $0x8] sm:$0xf]
        %v731 = vld [vmem:[%s485 + $0xc] sm:$0xf]
        %v736 = vunpack.c.l.b16 %v728
        %v737 = vunpack.c.l.b16 %v729
        %v738 = vunpack.c.l.b16 %v730
        %v739 = vunpack.c.l.b16 %v731
        %v740 = vpack.c.b16 %v737, %v736
        %v741 = vpack.c.b16 %v739, %v738
        %vm744 = vcmask 261120
        %v746 = vsel %vm744, %v727, 0
        %748 = vmatprep.subr.bf16.mxu0 0
        %749 = vmatpush1.bf16.msra.mxu0 %v740
        %750 = vmatprep.subr.bf16.mxu0 0
        %751 = vmatpush1.bf16.msra.mxu0 %v741
        %752 = vmatprep.subr.bf16.mxu0 0
        %753 = vmatpush1.bf16.msra.mxu0 0
        %754 = vmatprep.subr.bf16.mxu0 0
        %755 = vmatpush1.bf16.msra.mxu0 0
        %756 = vmatprep.subr.bf16.mxu0 0
        %757 = vmatpush1.bf16.msra.mxu0 0
        %758 = vmatprep.subr.bf16.mxu0 0
        %759 = vmatpush1.bf16.msra.mxu0 0
        %760 = vmatprep.subr.bf16.mxu0 0
        %761 = vmatpush1.bf16.msra.mxu0 0
        %762 = vmatprep.subr.bf16.mxu0 0
        %763 = vmatpush1.bf16.msra.mxu0 0
        %764 = vmatprep.subr.bf16.mxu0 0
        %765 = vmatpush1.bf16.msra.mxu0 0
        %766 = vmatprep.subr.bf16.mxu0 0
        %767 = vmatpush1.bf16.msra.mxu0 0
        %768 = vmatprep.subr.bf16.mxu0 0
        %769 = vmatpush1.bf16.msra.mxu0 0
        %770 = vmatprep.subr.bf16.mxu0 0
        %771 = vmatpush1.bf16.msra.mxu0 0
        %772 = vmatprep.subr.bf16.mxu0 0
        %773 = vmatpush1.bf16.msra.mxu0 0
        %774 = vmatprep.subr.bf16.mxu0 0
        %775 = vmatpush1.bf16.msra.mxu0 0
        %776 = vmatprep.subr.bf16.mxu0 0
        %777 = vmatpush1.bf16.msra.mxu0 0
        %778 = vmatprep.subr.bf16.mxu0 0
        %779 = vmatpush1.bf16.msra.mxu0 0
        %780 = vmatprep.mubr.bf16.mxu0 0
        %781 = vmatmul.mubr.bf16.gmra.mrb[0].mxu0 %v746
        %v782 = vpop.f32.mrb[0].mxu0
        %v783 = vadd.f32 0.0, %v782
        %v784 = vpop.f32.mrb[0].mxu0
        %v785 = vpop.f32.mrb[0].mxu0
        %v786 = vpop.f32.mrb[0].mxu0
        %787 = vdwg.mxu0
        %v788 = vpack.c.bf16 %v783, %v783
        %s789 = smul.addr %s44, 4
        %s790 = scalar_lea.vmem [#allocation2], %s789
        %v791 = vld [vmem:[%s790] sm:$0xf]
        %s792 = smul.addr %s44, 4
        %s793 = scalar_lea.vmem [#allocation3], %s792
        %v794 = vld [vmem:[%s793] sm:$0xf]
        %vm795 = vcmask 130048
        %v797 = vsel %vm795, %v788, 0
        %v800 = vsel %vm795, %v791, 0
        %802 = vmatprep.subr.bf16.mxu0 0
        %803 = vmatpush1.bf16.xpose.msra.mxu0 %v800
        %804 = vmatprep.subr.bf16.mxu0 0
        %805 = vmatpush1.bf16.xpose.msra.mxu0 0
        %806 = vmatprep.subr.bf16.mxu0 0
        %807 = vmatpush1.bf16.xpose.msra.mxu0 0
        %808 = vmatprep.subr.bf16.mxu0 0
        %809 = vmatpush1.bf16.xpose.msra.mxu0 0
        %810 = vmatprep.subr.bf16.mxu0 0
        %811 = vmatpush1.bf16.xpose.msra.mxu0 0
        %812 = vmatprep.subr.bf16.mxu0 0
        %813 = vmatpush1.bf16.xpose.msra.mxu0 0
        %814 = vmatprep.subr.bf16.mxu0 0
        %815 = vmatpush1.bf16.xpose.msra.mxu0 0
        %816 = vmatprep.subr.bf16.mxu0 0
        %817 = vmatpush1.bf16.xpose.msra.mxu0 0
        %818 = vmatprep.subr.bf16.mxu0 0
        %819 = vmatpush1.bf16.xpose.msra.mxu0 0
        %820 = vmatprep.subr.bf16.mxu0 0
        %821 = vmatpush1.bf16.xpose.msra.mxu0 0
        %822 = vmatprep.subr.bf16.mxu0 0
        %823 = vmatpush1.bf16.xpose.msra.mxu0 0
        %824 = vmatprep.subr.bf16.mxu0 0
        %825 = vmatpush1.bf16.xpose.msra.mxu0 0
        %826 = vmatprep.subr.bf16.mxu0 0
        %827 = vmatpush1.bf16.xpose.msra.mxu0 0
        %828 = vmatprep.subr.bf16.mxu0 0
        %829 = vmatpush1.bf16.xpose.msra.mxu0 0
        %830 = vmatprep.subr.bf16.mxu0 0
        %831 = vmatpush1.bf16.xpose.msra.mxu0 0
        %832 = vmatprep.subr.bf16.mxu0 0
        %833 = vmatpush1.bf16.xpose.msra.mxu0 0
        %834 = vmatprep.mubr.bf16.mxu0 0
        %835 = vmatmul.mubr.bf16.gmra.mrb[0].mxu0 %v797
        %v836 = vpop.f32.mrb[0].mxu0
        %v837 = vadd.f32 0.0, %v836
        %v838 = vpop.f32.mrb[0].mxu0
        %v839 = vpop.f32.mrb[0].mxu0
        %v840 = vpop.f32.mrb[0].mxu0
        %841 = vdwg.mxu0
        %v842 = vmul.f32 %v837, 0.25
        %v843 = vld [vmem:[%s525] sm:$0xff]
        %v844 = vadd.f32 %v842, %v843
        %vm845 = vcmask 64512
        %v846 = vsel %vm845, %v844, -inf
        %847 = vmax.xlane.f32.xlu0 %v846
        %v848 = vpop.xlane.xlu0 %847
        %v849 = vsub.f32 %v844, %v848
        %v850 = vmul.f32 %v849, 1.442695
        %v851 = vpow.pop %v850
        %v852 = vsel %vm845, %v851, 0.0
        %853 = vadd.xlane.f32.xlu0 %v852
        %v854 = vpop.xlane.xlu0 %853
        %v855 = vrcp.pop %v854
        %v856 = vmul.f32 %v851, %v855
        %v857 = vpack.c.bf16 %v856, %v856
        %v859 = vsel %vm845, %v857, 0
        %vm861 = vcmask 1043456
        %v863 = vsel %vm861, %v794, 0
        %865 = vmatprep.subr.bf16.mxu0 0
        %866 = vmatpush1.bf16.msra.mxu0 %v863
        %867 = vmatprep.subr.bf16.mxu0 0
        %868 = vmatpush1.bf16.msra.mxu0 0
        %869 = vmatprep.subr.bf16.mxu0 0
        %870 = vmatpush1.bf16.msra.mxu0 0
        %871 = vmatprep.subr.bf16.mxu0 0
        %872 = vmatpush1.bf16.msra.mxu0 0
        %873 = vmatprep.subr.bf16.mxu0 0
        %874 = vmatpush1.bf16.msra.mxu0 0
        %875 = vmatprep.subr.bf16.mxu0 0
        %876 = vmatpush1.bf16.msra.mxu0 0
        %877 = vmatprep.subr.bf16.mxu0 0
        %878 = vmatpush1.bf16.msra.mxu0 0
        %879 = vmatprep.subr.bf16.mxu0 0
        %880 = vmatpush1.bf16.msra.mxu0 0
        %881 = vmatprep.subr.bf16.mxu0 0
        %882 = vmatpush1.bf16.msra.mxu0 0
        %883 = vmatprep.subr.bf16.mxu0 0
        %884 = vmatpush1.bf16.msra.mxu0 0
        %885 = vmatprep.subr.bf16.mxu0 0
        %886 = vmatpush1.bf16.msra.mxu0 0
        %887 = vmatprep.subr.bf16.mxu0 0
        %888 = vmatpush1.bf16.msra.mxu0 0
        %889 = vmatprep.subr.bf16.mxu0 0
        %890 = vmatpush1.bf16.msra.mxu0 0
        %891 = vmatprep.subr.bf16.mxu0 0
        %892 = vmatpush1.bf16.msra.mxu0 0
        %893 = vmatprep.subr.bf16.mxu0 0
        %894 = vmatpush1.bf16.msra.mxu0 0
        %895 = vmatprep.subr.bf16.mxu0 0
        %896 = vmatpush1.bf16.msra.mxu0 0
        %897 = vmatprep.mubr.bf16.mxu0 0
        %898 = vmatmul.mubr.bf16.gmra.mrb[0].mxu0 %v859
        %v899 = vpop.f32.mrb[0].mxu0
        %v900 = vadd.f32 0.0, %v899
        %v901 = vpop.f32.mrb[0].mxu0
        %v902 = vpop.f32.mrb[0].mxu0
        %v903 = vpop.f32.mrb[0].mxu0
        %904 = vdwg.mxu0
        %v905 = vld [vmem:[#allocation4] sm:$0xff]
        %v906 = vpack.c.bf16 %v900, %v900
        %v907 = vld [vmem:[%s512] sm:$0xf]
        %v908 = vld [vmem:[%s512 + $0x4] sm:$0xf]
        %v911 = vunpack.c.l.b16 %v907
        %v912 = vunpack.c.l.b16 %v908
        %v913 = vpack.c.b16 %v912, %v911
        %v916 = vsel %vm795, %v906, 0
        %918 = vmatprep.subr.bf16.mxu0 0
        %919 = vmatpush1.bf16.msra.mxu0 %v913
        %920 = vmatprep.subr.bf16.mxu0 0
        %921 = vmatpush1.bf16.msra.mxu0 0
        %922 = vmatprep.subr.bf16.mxu0 0
        %923 = vmatpush1.bf16.msra.mxu0 0
        %924 = vmatprep.subr.bf16.mxu0 0
        %925 = vmatpush1.bf16.msra.mxu0 0
        %926 = vmatprep.subr.bf16.mxu0 0
        %927 = vmatpush1.bf16.msra.mxu0 0
        %928 = vmatprep.subr.bf16.mxu0 0
        %929 = vmatpush1.bf16.msra.mxu0 0
        %930 = vmatprep.subr.bf16.mxu0 0
        %931 = vmatpush1.bf16.msra.mxu0 0
        %932 = vmatprep.subr.bf16.mxu0 0
        %933 = vmatpush1.bf16.msra.mxu0 0
        %934 = vmatprep.subr.bf16.mxu0 0
        %935 = vmatpush1.bf16.msra.mxu0 0
        %936 = vmatprep.subr.bf16.mxu0 0
        %937 = vmatpush1.bf16.msra.mxu0 0
        %938 = vmatprep.subr.bf16.mxu0 0
        %939 = vmatpush1.bf16.msra.mxu0 0
        %940 = vmatprep.subr.bf16.mxu0 0
        %941 = vmatpush1.bf16.msra.mxu0 0
        %942 = vmatprep.subr.bf16.mxu0 0
        %943 = vmatpush1.bf16.msra.mxu0 0
        %944 = vmatprep.subr.bf16.mxu0 0
        %945 = vmatpush1.bf16.msra.mxu0 0
        %946 = vmatprep.subr.bf16.mxu0 0
        %947 = vmatpush1.bf16.msra.mxu0 0
        %948 = vmatprep.subr.bf16.mxu0 0
        %949 = vmatpush1.bf16.msra.mxu0 0
        %950 = vmatprep.mubr.bf16.mxu0 0
        %951 = vmatmul.mubr.bf16.gmra.mrb[0].mxu0 %v916
        %v952 = vpop.f32.mrb[0].mxu0
        %v953 = vadd.f32 0.0, %v952
        %v954 = vpop.f32.mrb[0].mxu0
        %v955 = vpop.f32.mrb[0].mxu0
        %v956 = vpop.f32.mrb[0].mxu0
        %957 = vdwg.mxu0
        %v958 = vadd.f32 %v905, %v953
        %959 = vst.msk [vmem:[#allocation4] sm:$0xff] %vm744, %v958
        %p960 = scmp.eq.s32.totalorder %s44, 3
        // Predicated region
        $region93: #{tpu_custom_call.1} parent=51 // pred_check
          %p961 = pneg %p960
        $region94: #{tpu_custom_call.1} parent=51 // pred_check_branch
          %963 = sbr.rel (%p961) target = $region96
        $region95: #{tpu_custom_call.1} parent=51 // pred_region
          %v964 = vld [vmem:[#allocation4] sm:$0xff]
          %v965 = vld [vmem:[#allocation16] sm:$0x1]
          %v967 = vlaneseq
          %v968 = vshrl.u32 %v967, 7
          %v969 = vsub.s32 0, %v968
          %v970 = vrot.slane %v965, %v969
          %v972 = vadd.f32 %v964, %v970
          %973 = vst.msk [vmem:[%s587] sm:$0xff] %vm744, %v972
        $region96: #{tpu_custom_call.1} parent=51 // pred_fallthru
          _
        %s974 = sand.u32 %s273, 1
        %s975 = scalar_lea.sflag [#allocation7], %s974
        %s976 = sand.u32 %s273, 1
        %s977 = smul.addr %s976, 8
        %s978 = scalar_lea.vmem [#allocation19], %s977
        // Predicated region
        $region97: #{tpu_custom_call.1} parent=51 // pred_check
          %p979 = pneg %p283
        $region98: #{tpu_custom_call.1} parent=51 // pred_check_branch
          %981 = sbr.rel (%p979) target = $region100
        $region99: #{tpu_custom_call.1} parent=51 // pred_region
          %s983 = ssub.s32 128, 128
          %984 = vsyncadd %s975, %s983
          %s985 = sadd.s32 %s43, %s42
          %s986 = smul.addr %s985, 128
          %s987 = scalar_lea.hbm %s8, %s986
          %s989 = sshll.u32 %s978, 4
          %s990 = int_to_ptr.vmem [resolvable:$true] %s989
          %992 = dma.vmem_to_hbm [thread:$0]  %s990, 128, %s987, %s975
        $region100: #{tpu_custom_call.1} parent=51 // pred_fallthru
          _
      $region52: #{tpu_custom_call.1} parent=5 // pred_fallthru
        _
      %p993 = scmp.le.s32.totalorder 2, %s32
      // Predicated region
      $region101: #{tpu_custom_call.1} parent=5 // pred_check
        %p994 = pneg %p993
      $region102: #{tpu_custom_call.1} parent=5 // pred_check_branch
        %996 = sbr.rel (%p994) target = $region104
      $region103: #{tpu_custom_call.1} parent=5 // pred_region
        %s997 = ssub.s32 %s32, 2
        // Predicated region
        $region105: #{tpu_custom_call.1} parent=103 // pred_check
          %p998 = pneg %p289
        $region106: #{tpu_custom_call.1} parent=103 // pred_check_branch
          %1000 = sbr.rel (%p998) target = $region108
        $region107: #{tpu_custom_call.1} parent=103 // pred_region
          %s1001 = sand.u32 %s274, 1
          %s1002 = scalar_lea.sflag [#allocation7], %s1001
          %s1003 = sand.u32 %s274, 1
          %s1004 = smul.addr %s1003, 8
          %s1005 = scalar_lea.vmem [#allocation19], %s1004
          %1006 = dma.done %s1002, 128
        $region108: #{tpu_custom_call.1} parent=103 // pred_fallthru
          _
      $region104: #{tpu_custom_call.1} parent=5 // pred_fallthru
        _
    $region6: #{tpu_custom_call.1} parent=1 // loop_footer
      %s36 = sadd.s32 1, %s32
    $region7: #{tpu_custom_call.1} parent=1 // loop_footer_branch
      %31 = sbr.rel target = $region3
    $region8: #{tpu_custom_call.1} parent=1 // loop_exit
      _
    %1007 = vsyncpa [#allocation6], 1
    %s1008 = scalar_lea.sflag [#allocation6], 1
    %1009 = vsyncpa %s1008, 1
    %1010 = vsyncpa [#allocation9], 1
    %s1011 = scalar_lea.sflag [#allocation9], 1
    %1012 = vsyncpa %s1011, 1
    %1013 = vsyncpa [#allocation12], 1
    %s1014 = scalar_lea.sflag [#allocation12], 1
    %1015 = vsyncpa %s1014, 1
    %1016 = vsyncpa [#allocation15], 1
    %s1017 = scalar_lea.sflag [#allocation15], 1
    %1018 = vsyncpa %s1017, 1
    %1019 = vsyncpa [#allocation18], 1
    %s1020 = scalar_lea.sflag [#allocation18], 1
    %1021 = vsyncpa %s1020, 1
    %1022 = vsyncpa [#allocation7], 1
    %s1023 = scalar_lea.sflag [#allocation7], 1
    %1024 = vsyncpa %s1023, 1

</llo_original>
